<compile_context>
chip_gen: v7x
topology: tpu7x:2x2x1
jax: 0.10.0
libtpu: 0.0.40
codegen_flags: <defaults>
</compile_context>

<pallas_src>
import functools

import jax
import jax.numpy as jnp
from jax import lax
from jax.experimental import pallas as pl
from jax.experimental.pallas import tpu as pltpu


# Contract the last dim of both 2-D operands: a[(m,k)] . b[(n,k)] -> (m,n)
# (mathematically a @ b.T, fed to the MXU without materializing a transpose).
_DN_LAST_LAST = (((1,), (1,)), ((), ()))


# ----------------------------------------------------------------------------
# Stage 1: QKV projection — computed exactly once per (batch, seq-tile).
# ----------------------------------------------------------------------------
def _qkv_proj_kernel(x_ref, wq_ref, wk_ref, wv_ref, q_ref, kT_ref, v_ref, *,
                     n_heads):
    """x_ref: (tn, C) bf16.  wq/wk: (H, qk, C), wv: (H, v, C) bf16 in nn.Linear
    layout (softmax scale pre-folded into wq).  Head-major outputs:
        q_ref: (H, tn, qk)    kT_ref: (H, qk, tn)    v_ref: (H, tn, v)
    K is written already transposed so the flash score matmul is a standard
    (tq, qk) @ (qk, tk) contraction.  Contraction dim is C (lane-full); the
    per-head loop is a one-time cost, not repeated per KV step.
    """
    x = x_ref[...]                                    # (tn, C) bf16
    for h in range(n_heads):
        q_ref[h] = lax.dot_general(
            x, wq_ref[h], _DN_LAST_LAST,
            preferred_element_type=jnp.float32).astype(q_ref.dtype)
        kT_ref[h] = lax.dot_general(
            wk_ref[h], x, _DN_LAST_LAST,
            preferred_element_type=jnp.float32).astype(kT_ref.dtype)
        v_ref[h] = lax.dot_general(
            x, wv_ref[h], _DN_LAST_LAST,
            preferred_element_type=jnp.float32).astype(v_ref.dtype)


def _qkv_projection(x_bf16, wq3, wk3, wv3, *, n_heads, qk_dim, v_dim, seq_block):
    B, N, C = x_bf16.shape
    tn = min(seq_block, N)
    assert N % tn == 0, "sequence length must tile evenly for the projection"

    grid = (B, N // tn)
    grid_spec = pltpu.PrefetchScalarGridSpec(
        num_scalar_prefetch=0,
        grid=grid,
        in_specs=[
            pl.BlockSpec((None, tn, C), lambda b, ni: (b, ni, 0)),
            pl.BlockSpec(wq3.shape, lambda b, ni: (0, 0, 0)),
            pl.BlockSpec(wk3.shape, lambda b, ni: (0, 0, 0)),
            pl.BlockSpec(wv3.shape, lambda b, ni: (0, 0, 0)),
        ],
        out_specs=[
            pl.BlockSpec((None, n_heads, tn, qk_dim), lambda b, ni: (b, 0, ni, 0)),
            pl.BlockSpec((None, n_heads, qk_dim, tn), lambda b, ni: (b, 0, 0, ni)),
            pl.BlockSpec((None, n_heads, tn, v_dim), lambda b, ni: (b, 0, ni, 0)),
        ],
    )
    return pl.pallas_call(
        functools.partial(_qkv_proj_kernel, n_heads=n_heads),
        out_shape=(
            jax.ShapeDtypeStruct((B, n_heads, N, qk_dim), jnp.bfloat16),
            jax.ShapeDtypeStruct((B, n_heads, qk_dim, N), jnp.bfloat16),
            jax.ShapeDtypeStruct((B, n_heads, N, v_dim), jnp.bfloat16),
        ),
        grid_spec=grid_spec,
        compiler_params=pltpu.CompilerParams(
            dimension_semantics=("parallel", "parallel")),
    )(x_bf16, wq3, wk3, wv3)


# ----------------------------------------------------------------------------
# Stage 2: flash attention (online softmax) + fused, lane-dense out-projection.
# ----------------------------------------------------------------------------
def _flash_attn_kernel(q_ref, kT_ref, v_ref, wo_ref, o_ref,
                       m_sc, l_sc, acc_sc, *, n_heads):
    """One grid step = one (batch, q-tile, kv-tile).

    q_ref  : (H, tq, qk)       bf16  (scale pre-folded)
    kT_ref : (H, qk, tk)       bf16  (K already transposed)
    v_ref  : (H, tk, v)        bf16
    wo_ref : (H*v, hidden_pad) bf16  (lane-dense effective out_proj.T)
    o_ref  : (tq, hidden_pad)  f32
    m_sc, l_sc : (H, tq, 1) f32  online-softmax running max / sum
    acc_sc     : (H, tq, v) f32  running (un-normalized) context
    """
    kv_idx = pl.program_id(2)

    @pl.when(kv_idx == 0)
    def _init():
        m_sc[...] = jnp.full_like(m_sc, -jnp.inf)
        l_sc[...] = jnp.zeros_like(l_sc)
        acc_sc[...] = jnp.zeros_like(acc_sc)

    # TODO(synk): for large head counts (>~8) switch this static unroll to
    # lax.fori_loop over the head axis to bound vreg live ranges.
    for h in range(n_heads):
        # Scores: native-orientation MXU matmul, f32 accumulation.
        s = jnp.dot(q_ref[h], kT_ref[h],
                    preferred_element_type=jnp.float32)          # (tq, tk)

        # Online softmax update (all elementwise work in f32).
        m_prev = m_sc[h]
        m_new = jnp.maximum(m_prev, jnp.max(s, axis=-1, keepdims=True))
        alpha = jnp.exp(m_prev - m_new)
        p = jnp.exp(s - m_new)
        l_sc[h] = alpha * l_sc[h] + jnp.sum(p, axis=-1, keepdims=True)
        acc_sc[h] = alpha * acc_sc[h] + jnp.dot(
            p.astype(jnp.bfloat16), v_ref[h],
            preferred_element_type=jnp.float32)
        m_sc[h] = m_new

    @pl.when(kv_idx == pl.num_programs(2) - 1)
    def _finalize():
        # Normalize with the (nearly free) EUP reciprocal, pack all heads once
        # into a (tq, H*v) bf16 operand and do ONE lane-dense out-projection
        # matmul (k = H*v, output lanes = hidden_pad, a multiple of 128).
        ctx = [(acc_sc[h] * pl.reciprocal(l_sc[h], approx=True)).astype(jnp.bfloat16)
               for h in range(n_heads)]
        packed = jnp.concatenate(ctx, axis=-1)                   # (tq, H*v)
        o_ref[...] = jnp.dot(packed, wo_ref[...],
                             preferred_element_type=jnp.float32).astype(o_ref.dtype)


def attention_forward(x, wq, wk, wv, wo, *, n_heads, qk_dim, v_dim,
                      q_block=256, kv_block=256, proj_block=256):
    """x: (B, N, C) float32.  Weights in nn.Linear (out_features, in_features) layout:
       wq, wk: (n_heads*qk_dim, C); wv: (n_heads*v_dim, C);
       wo (effective out_proj): (hidden_dim, n_heads*v_dim).
    Returns (B, N, hidden_dim) float32."""
    B, N, C = x.shape
    hidden_dim = wo.shape[0]
    scale = float(qk_dim) ** (-0.5)

    tq = min(q_block, N)
    tk = min(kv_block, N)
    assert N % tq == 0 and N % tk == 0, "sequence length must tile evenly"
    # TODO(synk): ragged N (not a multiple of the tile) would need masked tiles.

    # Lane-dense output: pad hidden to a multiple of 128 so the output tile is
    # stored with unmasked full-width vst (biggest single measured lever).
    hidden_pad = ((hidden_dim + 127) // 128) * 128

    # bf16 MXU operands everywhere (f32 accumulation inside the kernels).
    # Head-major weight layouts are built once, outside the kernels.  The
    # softmax scale is folded into wq here (in f32, before the bf16 cast).
    xb = x.astype(jnp.bfloat16)
    wq3 = (wq * scale).reshape(n_heads, qk_dim, C).astype(jnp.bfloat16)
    wk3 = wk.reshape(n_heads, qk_dim, C).astype(jnp.bfloat16)
    wv3 = wv.reshape(n_heads, v_dim, C).astype(jnp.bfloat16)
    wo2 = wo.T                                        # (H*v, hidden) lane-dense
    if hidden_pad != hidden_dim:
        wo2 = jnp.pad(wo2, ((0, 0), (0, hidden_pad - hidden_dim)))
    wo2 = wo2.astype(jnp.bfloat16)

    # Stage 1: project Q / K^T / V exactly once (no recompute per q/KV tile).
    q, kT, v = _qkv_projection(xb, wq3, wk3, wv3, n_heads=n_heads,
                               qk_dim=qk_dim, v_dim=v_dim, seq_block=proj_block)

    # Stage 2: flash attention + fused out-projection.
    kernel = functools.partial(_flash_attn_kernel, n_heads=n_heads)
    grid = (B, N // tq, N // tk)
    grid_spec = pltpu.PrefetchScalarGridSpec(
        num_scalar_prefetch=0,
        grid=grid,
        in_specs=[
            # Q tile: constant across the KV axis -> fetched once per q-tile.
            pl.BlockSpec((None, n_heads, tq, qk_dim),
                         lambda b, qi, ki: (b, 0, qi, 0)),
            # K^T tile: one (H, qk, tk) slab per KV step.
            pl.BlockSpec((None, n_heads, qk_dim, tk),
                         lambda b, qi, ki: (b, 0, 0, ki)),
            # V tile: one (H, tk, v) slab per KV step.
            pl.BlockSpec((None, n_heads, tk, v_dim),
                         lambda b, qi, ki: (b, 0, ki, 0)),
            # Effective out_proj weight (small, lane-dense, constant index).
            pl.BlockSpec(wo2.shape, lambda b, qi, ki: (0, 0)),
        ],
        out_specs=pl.BlockSpec((None, tq, hidden_pad),
                               lambda b, qi, ki: (b, qi, 0)),
        scratch_shapes=[
            pltpu.VMEM((n_heads, tq, 1), jnp.float32),       # running max m
            pltpu.VMEM((n_heads, tq, 1), jnp.float32),       # running sum l
            pltpu.VMEM((n_heads, tq, v_dim), jnp.float32),   # running context
        ],
    )

    out = pl.pallas_call(
        kernel,
        out_shape=jax.ShapeDtypeStruct((B, N, hidden_pad), jnp.float32),
        grid_spec=grid_spec,
        compiler_params=pltpu.CompilerParams(
            # Batch / q-tile axes independent (megacore-shardable on v7x);
            # KV axis carries the online-softmax accumulators.
            dimension_semantics=("parallel", "parallel", "arbitrary")),
    )(q, kT, v, wo2)

    if hidden_pad != hidden_dim:
        out = out[..., :hidden_dim]
    return out


def attention_reference(x, wq, wk, wv, wo, *, n_heads, qk_dim, v_dim):
    """Pure-JAX f32 mirror of the PyTorch forward (non-fused path), for validation."""
    B, N, C = x.shape
    scale = float(qk_dim) ** (-0.5)
    q = (x @ wq.T).reshape(B, N, n_heads, qk_dim).transpose(0, 2, 1, 3)
    k = (x @ wk.T).reshape(B, N, n_heads, qk_dim).transpose(0, 2, 1, 3)
    v = (x @ wv.T).reshape(B, N, n_heads, v_dim).transpose(0, 2, 1, 3)
    attn = jax.nn.softmax((q * scale) @ jnp.swapaxes(k, -2, -1), axis=-1)
    o = (attn @ v).transpose(0, 2, 1, 3).reshape(B, N, n_heads * v_dim)
    return o @ wo.T


if __name__ == "__main__":
    # Small shapes consistent with the module's forward.
    B, N, hidden_dim = 2, 8, 32
    n_heads, qk_dim, v_dim = 2, 16, 16
    # qkv_bias=False, out_bias=False (module defaults) -> no bias parameters.

    key = jax.random.PRNGKey(0)
    kx, kq, kk, kv, ko = jax.random.split(key, 5)

    x = jax.random.normal(kx, (B, N, hidden_dim), dtype=jnp.float32)

    # Deterministic nn.Linear-style weights: (out_features, in_features).
    def init_linear(k, out_f, in_f):
        bound = 1.0 / (in_f ** 0.5)
        return jax.random.uniform(k, (out_f, in_f), jnp.float32, -bound, bound)

    wq = init_linear(kq, qk_dim * n_heads, hidden_dim)
    wk = init_linear(kk, qk_dim * n_heads, hidden_dim)
    wv = init_linear(kv, v_dim * n_heads, hidden_dim)
    # Effective out_proj weight: (hidden_dim, v_dim * n_heads) -- see layout note.
    wo = init_linear(ko, hidden_dim, v_dim * n_heads)

    out = attention_forward(x, wq, wk, wv, wo,
                            n_heads=n_heads, qk_dim=qk_dim, v_dim=v_dim)
    out = jax.block_until_ready(out)

    ref = attention_reference(x, wq, wk, wv, wo,
                              n_heads=n_heads, qk_dim=qk_dim, v_dim=v_dim)
    assert out.shape == (B, N, hidden_dim)
    # Tolerance loosened vs. pure f32 because the kernels use bf16 MXU operands
    # (with f32 accumulation) and an approximate EUP reciprocal.
    assert jnp.allclose(out, ref, atol=2e-2, rtol=2e-2), "mismatch vs reference"

    print("KERNEL_OK")
</pallas_src>

<mosaic_0001>
module attributes {stable_mosaic.version = 11 : i64} {
  func.func @_qkv_proj_kernel(%arg0: i32, %arg1: i32, %arg2: memref<1x8x32xbf16, #tpu.memory_space<vmem>>, %arg3: memref<2x16x32xbf16, #tpu.memory_space<vmem>>, %arg4: memref<2x16x32xbf16, #tpu.memory_space<vmem>>, %arg5: memref<2x16x32xbf16, #tpu.memory_space<vmem>>, %arg6: memref<1x2x8x16xbf16, #tpu.memory_space<vmem>>, %arg7: memref<1x2x16x8xbf16, #tpu.memory_space<vmem>>, %arg8: memref<1x2x8x16xbf16, #tpu.memory_space<vmem>>) attributes {dimension_semantics = [#tpu.dimension_semantics<parallel>, #tpu.dimension_semantics<parallel>], iteration_bounds = array<i64: 2, 1>, scalar_prefetch = 0 : i64, scratch_operands = 0 : i64, tpu.core_type = #tpu.core_type<tc>, window_params = [{transform_indices = @transform_0, window_bounds = array<i64: 1, 8, 32>}, {pipeline_mode = #tpu.pipeline_mode<synchronous>, transform_indices = @transform_1, window_bounds = array<i64: 2, 16, 32>}, {pipeline_mode = #tpu.pipeline_mode<synchronous>, transform_indices = @transform_2, window_bounds = array<i64: 2, 16, 32>}, {pipeline_mode = #tpu.pipeline_mode<synchronous>, transform_indices = @transform_3, window_bounds = array<i64: 2, 16, 32>}, {transform_indices = @transform_4, window_bounds = array<i64: 1, 2, 8, 16>}, {transform_indices = @transform_5, window_bounds = array<i64: 1, 2, 16, 8>}, {transform_indices = @transform_6, window_bounds = array<i64: 1, 2, 8, 16>}]} {
    %c0 = arith.constant 0 : index
    %c0_0 = arith.constant 0 : index
    %c0_1 = arith.constant 0 : index
    %0 = vector.load %arg2[%c0, %c0_0, %c0_1] : memref<1x8x32xbf16, #tpu.memory_space<vmem>>, vector<1x8x32xbf16>
    %1 = vector.shape_cast %0 : vector<1x8x32xbf16> to vector<8x32xbf16>
    %c0_2 = arith.constant 0 : index
    %c0_3 = arith.constant 0 : index
    %c0_4 = arith.constant 0 : index
    %2 = vector.load %arg3[%c0_2, %c0_3, %c0_4] : memref<2x16x32xbf16, #tpu.memory_space<vmem>>, vector<1x16x32xbf16>
    %3 = vector.shape_cast %2 : vector<1x16x32xbf16> to vector<16x32xbf16>
    %cst = arith.constant dense<0.000000e+00> : vector<8x16xf32>
    %4 = tpu.matmul %1, %3, %cst {dimension_numbers = #tpu.dot_dimension_numbers<[1], [1], [0], [0], [0, 0, 1, 0], [], []>} : vector<8x32xbf16>, vector<16x32xbf16>, vector<8x16xf32> -> vector<8x16xf32>
    %5 = arith.truncf %4 : vector<8x16xf32> to vector<8x16xbf16>
    %c0_5 = arith.constant 0 : index
    %c0_6 = arith.constant 0 : index
    %c0_7 = arith.constant 0 : index
    %c0_8 = arith.constant 0 : index
    %6 = vector.load %arg6[%c0_5, %c0_6, %c0_7, %c0_8] : memref<1x2x8x16xbf16, #tpu.memory_space<vmem>>, vector<1x1x8x16xbf16>
    %7 = vector.shape_cast %6 : vector<1x1x8x16xbf16> to vector<8x16xbf16>
    %8 = vector.shape_cast %5 : vector<8x16xbf16> to vector<1x1x8x16xbf16>
    tpu.vector_store %arg6[%c0_5, %c0_6, %c0_7, %c0_8], %8 {strides = array<i32>} : memref<1x2x8x16xbf16, #tpu.memory_space<vmem>>, vector<1x1x8x16xbf16>,
    %c0_9 = arith.constant 0 : index
    %c0_10 = arith.constant 0 : index
    %c0_11 = arith.constant 0 : index
    %9 = vector.load %arg4[%c0_9, %c0_10, %c0_11] : memref<2x16x32xbf16, #tpu.memory_space<vmem>>, vector<1x16x32xbf16>
    %10 = vector.shape_cast %9 : vector<1x16x32xbf16> to vector<16x32xbf16>
    %cst_12 = arith.constant dense<0.000000e+00> : vector<16x8xf32>
    %11 = tpu.matmul %10, %1, %cst_12 {dimension_numbers = #tpu.dot_dimension_numbers<[1], [1], [0], [0], [0, 0, 1, 0], [], []>} : vector<16x32xbf16>, vector<8x32xbf16>, vector<16x8xf32> -> vector<16x8xf32>
    %12 = arith.truncf %11 : vector<16x8xf32> to vector<16x8xbf16>
    %c0_13 = arith.constant 0 : index
    %c0_14 = arith.constant 0 : index
    %c0_15 = arith.constant 0 : index
    %c0_16 = arith.constant 0 : index
    %13 = vector.load %arg7[%c0_13, %c0_14, %c0_15, %c0_16] : memref<1x2x16x8xbf16, #tpu.memory_space<vmem>>, vector<1x1x16x8xbf16>
    %14 = vector.shape_cast %13 : vector<1x1x16x8xbf16> to vector<16x8xbf16>
    %15 = vector.shape_cast %12 : vector<16x8xbf16> to vector<1x1x16x8xbf16>
    tpu.vector_store %arg7[%c0_13, %c0_14, %c0_15, %c0_16], %15 {strides = array<i32>} : memref<1x2x16x8xbf16, #tpu.memory_space<vmem>>, vector<1x1x16x8xbf16>,
    %c0_17 = arith.constant 0 : index
    %c0_18 = arith.constant 0 : index
    %c0_19 = arith.constant 0 : index
    %16 = vector.load %arg5[%c0_17, %c0_18, %c0_19] : memref<2x16x32xbf16, #tpu.memory_space<vmem>>, vector<1x16x32xbf16>
    %17 = vector.shape_cast %16 : vector<1x16x32xbf16> to vector<16x32xbf16>
    %cst_20 = arith.constant dense<0.000000e+00> : vector<8x16xf32>
    %18 = tpu.matmul %1, %17, %cst_20 {dimension_numbers = #tpu.dot_dimension_numbers<[1], [1], [0], [0], [0, 0, 1, 0], [], []>} : vector<8x32xbf16>, vector<16x32xbf16>, vector<8x16xf32> -> vector<8x16xf32>
    %19 = arith.truncf %18 : vector<8x16xf32> to vector<8x16xbf16>
    %c0_21 = arith.constant 0 : index
    %c0_22 = arith.constant 0 : index
    %c0_23 = arith.constant 0 : index
    %c0_24 = arith.constant 0 : index
    %20 = vector.load %arg8[%c0_21, %c0_22, %c0_23, %c0_24] : memref<1x2x8x16xbf16, #tpu.memory_space<vmem>>, vector<1x1x8x16xbf16>
    %21 = vector.shape_cast %20 : vector<1x1x8x16xbf16> to vector<8x16xbf16>
    %22 = vector.shape_cast %19 : vector<8x16xbf16> to vector<1x1x8x16xbf16>
    tpu.vector_store %arg8[%c0_21, %c0_22, %c0_23, %c0_24], %22 {strides = array<i32>} : memref<1x2x8x16xbf16, #tpu.memory_space<vmem>>, vector<1x1x8x16xbf16>,
    %c1 = arith.constant 1 : index
    %c0_25 = arith.constant 0 : index
    %c0_26 = arith.constant 0 : index
    %23 = vector.load %arg3[%c1, %c0_25, %c0_26] : memref<2x16x32xbf16, #tpu.memory_space<vmem>>, vector<1x16x32xbf16>
    %24 = vector.shape_cast %23 : vector<1x16x32xbf16> to vector<16x32xbf16>
    %cst_27 = arith.constant dense<0.000000e+00> : vector<8x16xf32>
    %25 = tpu.matmul %1, %24, %cst_27 {dimension_numbers = #tpu.dot_dimension_numbers<[1], [1], [0], [0], [0, 0, 1, 0], [], []>} : vector<8x32xbf16>, vector<16x32xbf16>, vector<8x16xf32> -> vector<8x16xf32>
    %26 = arith.truncf %25 : vector<8x16xf32> to vector<8x16xbf16>
    %c0_28 = arith.constant 0 : index
    %c1_29 = arith.constant 1 : index
    %c0_30 = arith.constant 0 : index
    %c0_31 = arith.constant 0 : index
    %27 = vector.load %arg6[%c0_28, %c1_29, %c0_30, %c0_31] : memref<1x2x8x16xbf16, #tpu.memory_space<vmem>>, vector<1x1x8x16xbf16>
    %28 = vector.shape_cast %27 : vector<1x1x8x16xbf16> to vector<8x16xbf16>
    %29 = vector.shape_cast %26 : vector<8x16xbf16> to vector<1x1x8x16xbf16>
    tpu.vector_store %arg6[%c0_28, %c1_29, %c0_30, %c0_31], %29 {strides = array<i32>} : memref<1x2x8x16xbf16, #tpu.memory_space<vmem>>, vector<1x1x8x16xbf16>,
    %c1_32 = arith.constant 1 : index
    %c0_33 = arith.constant 0 : index
    %c0_34 = arith.constant 0 : index
    %30 = vector.load %arg4[%c1_32, %c0_33, %c0_34] : memref<2x16x32xbf16, #tpu.memory_space<vmem>>, vector<1x16x32xbf16>
    %31 = vector.shape_cast %30 : vector<1x16x32xbf16> to vector<16x32xbf16>
    %cst_35 = arith.constant dense<0.000000e+00> : vector<16x8xf32>
    %32 = tpu.matmul %31, %1, %cst_35 {dimension_numbers = #tpu.dot_dimension_numbers<[1], [1], [0], [0], [0, 0, 1, 0], [], []>} : vector<16x32xbf16>, vector<8x32xbf16>, vector<16x8xf32> -> vector<16x8xf32>
    %33 = arith.truncf %32 : vector<16x8xf32> to vector<16x8xbf16>
    %c0_36 = arith.constant 0 : index
    %c1_37 = arith.constant 1 : index
    %c0_38 = arith.constant 0 : index
    %c0_39 = arith.constant 0 : index
    %34 = vector.load %arg7[%c0_36, %c1_37, %c0_38, %c0_39] : memref<1x2x16x8xbf16, #tpu.memory_space<vmem>>, vector<1x1x16x8xbf16>
    %35 = vector.shape_cast %34 : vector<1x1x16x8xbf16> to vector<16x8xbf16>
    %36 = vector.shape_cast %33 : vector<16x8xbf16> to vector<1x1x16x8xbf16>
    tpu.vector_store %arg7[%c0_36, %c1_37, %c0_38, %c0_39], %36 {strides = array<i32>} : memref<1x2x16x8xbf16, #tpu.memory_space<vmem>>, vector<1x1x16x8xbf16>,
    %c1_40 = arith.constant 1 : index
    %c0_41 = arith.constant 0 : index
    %c0_42 = arith.constant 0 : index
    %37 = vector.load %arg5[%c1_40, %c0_41, %c0_42] : memref<2x16x32xbf16, #tpu.memory_space<vmem>>, vector<1x16x32xbf16>
    %38 = vector.shape_cast %37 : vector<1x16x32xbf16> to vector<16x32xbf16>
    %cst_43 = arith.constant dense<0.000000e+00> : vector<8x16xf32>
    %39 = tpu.matmul %1, %38, %cst_43 {dimension_numbers = #tpu.dot_dimension_numbers<[1], [1], [0], [0], [0, 0, 1, 0], [], []>} : vector<8x32xbf16>, vector<16x32xbf16>, vector<8x16xf32> -> vector<8x16xf32>
    %40 = arith.truncf %39 : vector<8x16xf32> to vector<8x16xbf16>
    %c0_44 = arith.constant 0 : index
    %c1_45 = arith.constant 1 : index
    %c0_46 = arith.constant 0 : index
    %c0_47 = arith.constant 0 : index
    %41 = vector.load %arg8[%c0_44, %c1_45, %c0_46, %c0_47] : memref<1x2x8x16xbf16, #tpu.memory_space<vmem>>, vector<1x1x8x16xbf16>
    %42 = vector.shape_cast %41 : vector<1x1x8x16xbf16> to vector<8x16xbf16>
    %43 = vector.shape_cast %40 : vector<8x16xbf16> to vector<1x1x8x16xbf16>
    tpu.vector_store %arg8[%c0_44, %c1_45, %c0_46, %c0_47], %43 {strides = array<i32>} : memref<1x2x8x16xbf16, #tpu.memory_space<vmem>>, vector<1x1x8x16xbf16>,
    return
  }
  func.func @transform_0(%arg0: i32, %arg1: i32) -> (i32, i32, i32) {
    %c0_i32 = arith.constant 0 : i32
    %c0_i32_0 = arith.constant 0 : i32
    return %arg0, %arg1, %c0_i32 : i32, i32, i32
  }
  func.func @transform_1(%arg0: i32, %arg1: i32) -> (i32, i32, i32) {
    %c0_i32 = arith.constant 0 : i32
    %c0_i32_0 = arith.constant 0 : i32
    %c0_i32_1 = arith.constant 0 : i32
    %c0_i32_2 = arith.constant 0 : i32
    return %c0_i32, %c0_i32_0, %c0_i32_1 : i32, i32, i32
  }
  func.func @transform_2(%arg0: i32, %arg1: i32) -> (i32, i32, i32) {
    %c0_i32 = arith.constant 0 : i32
    %c0_i32_0 = arith.constant 0 : i32
    %c0_i32_1 = arith.constant 0 : i32
    %c0_i32_2 = arith.constant 0 : i32
    return %c0_i32, %c0_i32_0, %c0_i32_1 : i32, i32, i32
  }
  func.func @transform_3(%arg0: i32, %arg1: i32) -> (i32, i32, i32) {
    %c0_i32 = arith.constant 0 : i32
    %c0_i32_0 = arith.constant 0 : i32
    %c0_i32_1 = arith.constant 0 : i32
    %c0_i32_2 = arith.constant 0 : i32
    return %c0_i32, %c0_i32_0, %c0_i32_1 : i32, i32, i32
  }
  func.func @transform_4(%arg0: i32, %arg1: i32) -> (i32, i32, i32, i32) {
    %c0_i32 = arith.constant 0 : i32
    %c0_i32_0 = arith.constant 0 : i32
    %c0_i32_1 = arith.constant 0 : i32
    return %arg0, %c0_i32, %arg1, %c0_i32_0 : i32, i32, i32, i32
  }
  func.func @transform_5(%arg0: i32, %arg1: i32) -> (i32, i32, i32, i32) {
    %c0_i32 = arith.constant 0 : i32
    %c0_i32_0 = arith.constant 0 : i32
    %c0_i32_1 = arith.constant 0 : i32
    return %arg0, %c0_i32, %c0_i32_0, %arg1 : i32, i32, i32, i32
  }
  func.func @transform_6(%arg0: i32, %arg1: i32) -> (i32, i32, i32, i32) {
    %c0_i32 = arith.constant 0 : i32
    %c0_i32_0 = arith.constant 0 : i32
    %c0_i32_1 = arith.constant 0 : i32
    return %arg0, %c0_i32, %arg1, %c0_i32_0 : i32, i32, i32, i32
  }
}

</mosaic_0001>

<llo_original>
// kernel: tpu_custom_call.1
$region0: #{tpu_custom_call.1}
  #allocation0 [shape = 'u32[]', space=smem, size = 0x4, offset = 0x4, fixed_abs, tag = 'smem constant byte address 0x4 - core index']
  #allocation1 [shape = 'u32[144,128]{1,0:T(1,128)}', space=vmem, size = 0x12000, scoped, tag = 'internal scratch']
  %s0 = inlined_call_operand.hbm [shape: bf16[2,8,32], index: 0, kind: input, shape index: {}]
  %s1 = inlined_call_operand.hbm [shape: bf16[2,16,32], index: 1, kind: input, shape index: {}]
  %s2 = inlined_call_operand.hbm [shape: bf16[2,16,32], index: 2, kind: input, shape index: {}]
  %s3 = inlined_call_operand.hbm [shape: bf16[2,16,32], index: 3, kind: input, shape index: {}]
  %s4 = inlined_call_operand.hbm [shape: bf16[2,2,8,16], index: 4, kind: output, shape index: {0}]
  %s5 = inlined_call_operand.vmem [shape: bf16[2,2,16,8], index: 5, kind: output, shape index: {1}]
  %s6 = inlined_call_operand.hbm [shape: bf16[2,2,8,16], index: 6, kind: output, shape index: {2}]
  %7 = xla_tuple %s4, %s5, %s6
  %s8 = sld [smem:[#allocation0]]
  $region81: #{tpu_custom_call.1} parent=0
    _
  %s10 = ssub.s32 1, %s8
  %s11 = scalar_select 0, %s10, %s8
  $region1: #{tpu_custom_call.1} parent=0
    #allocation2 [shape = 'u8[4096]{0}', space=vmem, size = 0x1000, scoped, tag = 'input window, operand 0']
    #allocation3 [shape = 's32[2]{0}', space=sflag, size = 0x8, scoped, tag = 'scoped memory for tpu_custom_call.1']
    #allocation4 [shape = 's32[2]{0}', space=sflag, size = 0x8, scoped, tag = 'scoped memory for tpu_custom_call.1']
    #allocation5 [shape = 'u8[8192]{0}', space=vmem, size = 0x2000, scoped, tag = 'input window, operand 1, single buffered']
    #allocation6 [shape = 's32[1]{0}', space=sflag, size = 0x4, scoped, tag = 'scoped memory for tpu_custom_call.1']
    #allocation7 [shape = 'u8[8192]{0}', space=vmem, size = 0x2000, scoped, tag = 'input window, operand 2, single buffered']
    #allocation8 [shape = 'u8[8192]{0}', space=vmem, size = 0x2000, scoped, tag = 'input window, operand 3, single buffered']
    #allocation9 [shape = 's32[1]{0}', space=sflag, size = 0x4, scoped, tag = 'scoped memory for tpu_custom_call.1']
    #allocation10 [shape = 'u8[8192]{0}', space=vmem, size = 0x2000, scoped, tag = 'output window, operand 0']
    #allocation11 [shape = 'u8[8192]{0}', space=vmem, size = 0x2000, scoped, tag = 'output window, operand 2']
    #allocation12 [shape = 's32[2]{0}', space=sflag, size = 0x8, scoped, tag = 'scoped memory for tpu_custom_call.1']
    %12 = vsyncpa [#allocation3], 0
    %s13 = scalar_lea.sflag [#allocation3], 1
    %14 = vsyncpa %s13, 0
    %15 = vsyncpa [#allocation6], 0
    %16 = vsyncpa [#allocation9], 0
    %17 = vsyncpa [#allocation4], 0
    %s18 = scalar_lea.sflag [#allocation4], 1
    %19 = vsyncpa %s18, 0
    %20 = vsyncpa [#allocation12], 0
    %s21 = scalar_lea.sflag [#allocation12], 1
    %22 = vsyncpa %s21, 0
    loop: start=0, step=1, limit=4
    $region2: #{tpu_custom_call.1} parent=1 // loop_pre_header
      _
    $region3: #{tpu_custom_call.1} parent=1 // loop_header
      %s24 = sphi 0, %s28
      %p25 = scmp.ge.s32.totalorder %s24, 4
      %s31 = sphi 0, %s43
      %s32 = sphi 0, %s39
      %s33 = sphi 0, %s31
      %s34 = sphi 0, %s32
      %s35 = sphi 0, %s33
      %s36 = sphi 0, %s34
      %s48 = sphi 0, %s50
      %s51 = sphi 0, %s48
      %s52 = sphi 0, %s51
      %s68 = sphi 0, %s52
      %s72 = sphi 0, %s72
      %s74 = sphi 0, %s72
      %s75 = sphi 0, %s74
      %s89 = sphi 0, %s75
      %s93 = sphi 0, %s93
      %s95 = sphi 0, %s93
      %s96 = sphi 0, %s95
      %s110 = sphi 0, %s96
      %s114 = sphi 0, %s114
      %s116 = sphi 0, %s114
      %s117 = sphi 0, %s116
      %s131 = sphi 0, %s117
      %s139 = sphi 0, %s141
      %s142 = sphi 0, %s139
      %s143 = sphi 0, %s142
      %s159 = sphi 0, %s143
      %s167 = sphi 0, %s169
      %s170 = sphi 0, %s167
      %s171 = sphi 0, %s170
      %s187 = sphi 0, %s171
      %s195 = sphi 0, %s197
      %s198 = sphi 0, %s195
      %s199 = sphi 0, %s198
      %s215 = sphi 0, %s199
    $region4: #{tpu_custom_call.1} parent=1 // loop_header_branch
      %27 = sbr.rel (%p25) target = $region8
    $region5: #{tpu_custom_call.1} parent=1 // loop_body
      %s29 = ssub.s32 %s24, 1
      %s30 = ssub.s32 %s24, 2
      %s37 = sadd.s32 1, %s32
      %p38 = scmp.ge.s32.totalorder %s37, 1
      %s39 = scalar_select %p38, 0, %s37
      %s40 = sadd.s32 1, %s31
      %s41 = scalar_select %p38, %s40, %s31
      %p42 = scmp.ge.s32.totalorder %s41, 2
      %s43 = scalar_select %p42, 0, %s41
      %s44 = ssub.s32 %s31, %s43
      %s45 = ssub.s32 %s32, %s39
      %s46 = sor.u32 %s44, %s45
      %p47 = scmp.eq.s32.totalorder %s46, 0
      %s49 = sadd.s32 %s48, 1
      %s50 = scalar_select %p47, %s48, %s49
      %p53 = pneg %p47
      %p54 = scmp.eq.s32.totalorder %s24, 1
      %p55 = por %p53, %p54
      %p56 = scmp.ne.s32.totalorder %s48, %s51
      %p57 = scmp.eq.s32.totalorder %s24, 0
      %p58 = por %p56, %p57
      %p59 = scmp.ne.s32.totalorder %s48, %s51
      %p60 = scmp.eq.s32.totalorder %s29, 1
      %p61 = por %p59, %p60
      %p62 = scmp.ne.s32.totalorder %s51, %s52
      %p63 = scmp.eq.s32.totalorder %s29, 0
      %p64 = por %p62, %p63
      %p65 = scmp.ne.s32.totalorder %s51, %s52
      %p66 = scmp.eq.s32.totalorder %s30, 1
      %p67 = por %p65, %p66
      %p69 = scmp.ne.s32.totalorder %s52, %s68
      %p70 = scmp.eq.s32.totalorder %s30, 0
      %p71 = por %p69, %p70
      %s73 = sadd.s32 %s72, 1
      %p76 = scmp.eq.s32.totalorder %s24, 1
      %p77 = scmp.ne.s32.totalorder %s72, %s74
      %p78 = scmp.eq.s32.totalorder %s24, 0
      %p79 = por %p77, %p78
      %p80 = scmp.ne.s32.totalorder %s72, %s74
      %p81 = scmp.eq.s32.totalorder %s29, 1
      %p82 = por %p80, %p81
      %p83 = scmp.ne.s32.totalorder %s74, %s75
      %p84 = scmp.eq.s32.totalorder %s29, 0
      %p85 = por %p83, %p84
      %p86 = scmp.ne.s32.totalorder %s74, %s75
      %p87 = scmp.eq.s32.totalorder %s30, 1
      %p88 = por %p86, %p87
      %p90 = scmp.ne.s32.totalorder %s75, %s89
      %p91 = scmp.eq.s32.totalorder %s30, 0
      %p92 = por %p90, %p91
      %s94 = sadd.s32 %s93, 1
      %p97 = scmp.eq.s32.totalorder %s24, 1
      %p98 = scmp.ne.s32.totalorder %s93, %s95
      %p99 = scmp.eq.s32.totalorder %s24, 0
      %p100 = por %p98, %p99
      %p101 = scmp.ne.s32.totalorder %s93, %s95
      %p102 = scmp.eq.s32.totalorder %s29, 1
      %p103 = por %p101, %p102
      %p104 = scmp.ne.s32.totalorder %s95, %s96
      %p105 = scmp.eq.s32.totalorder %s29, 0
      %p106 = por %p104, %p105
      %p107 = scmp.ne.s32.totalorder %s95, %s96
      %p108 = scmp.eq.s32.totalorder %s30, 1
      %p109 = por %p107, %p108
      %p111 = scmp.ne.s32.totalorder %s96, %s110
      %p112 = scmp.eq.s32.totalorder %s30, 0
      %p113 = por %p111, %p112
      %s115 = sadd.s32 %s114, 1
      %p118 = scmp.eq.s32.totalorder %s24, 1
      %p119 = scmp.ne.s32.totalorder %s114, %s116
      %p120 = scmp.eq.s32.totalorder %s24, 0
      %p121 = por %p119, %p120
      %p122 = scmp.ne.s32.totalorder %s114, %s116
      %p123 = scmp.eq.s32.totalorder %s29, 1
      %p124 = por %p122, %p123
      %p125 = scmp.ne.s32.totalorder %s116, %s117
      %p126 = scmp.eq.s32.totalorder %s29, 0
      %p127 = por %p125, %p126
      %p128 = scmp.ne.s32.totalorder %s116, %s117
      %p129 = scmp.eq.s32.totalorder %s30, 1
      %p130 = por %p128, %p129
      %p132 = scmp.ne.s32.totalorder %s117, %s131
      %p133 = scmp.eq.s32.totalorder %s30, 0
      %p134 = por %p132, %p133
      %s135 = ssub.s32 %s31, %s43
      %s136 = ssub.s32 %s32, %s39
      %s137 = sor.u32 %s135, %s136
      %p138 = scmp.eq.s32.totalorder %s137, 0
      %s140 = sadd.s32 %s139, 1
      %s141 = scalar_select %p138, %s139, %s140
      %p144 = pneg %p138
      %p145 = scmp.eq.s32.totalorder %s24, 1
      %p146 = por %p144, %p145
      %p147 = scmp.ne.s32.totalorder %s139, %s142
      %p148 = scmp.eq.s32.totalorder %s24, 0
      %p149 = por %p147, %p148
      %p150 = scmp.ne.s32.totalorder %s139, %s142
      %p151 = scmp.eq.s32.totalorder %s29, 1
      %p152 = por %p150, %p151
      %p153 = scmp.ne.s32.totalorder %s142, %s143
      %p154 = scmp.eq.s32.totalorder %s29, 0
      %p155 = por %p153, %p154
      %p156 = scmp.ne.s32.totalorder %s142, %s143
      %p157 = scmp.eq.s32.totalorder %s30, 1
      %p158 = por %p156, %p157
      %p160 = scmp.ne.s32.totalorder %s143, %s159
      %p161 = scmp.eq.s32.totalorder %s30, 0
      %p162 = por %p160, %p161
      %s163 = ssub.s32 %s31, %s43
      %s164 = ssub.s32 %s32, %s39
      %s165 = sor.u32 %s163, %s164
      %p166 = scmp.eq.s32.totalorder %s165, 0
      %s168 = sadd.s32 %s167, 1
      %s169 = scalar_select %p166, %s167, %s168
      %p172 = pneg %p166
      %p173 = scmp.eq.s32.totalorder %s24, 1
      %p174 = por %p172, %p173
      %p175 = scmp.ne.s32.totalorder %s167, %s170
      %p176 = scmp.eq.s32.totalorder %s24, 0
      %p177 = por %p175, %p176
      %p178 = scmp.ne.s32.totalorder %s167, %s170
      %p179 = scmp.eq.s32.totalorder %s29, 1
      %p180 = por %p178, %p179
      %p181 = scmp.ne.s32.totalorder %s170, %s171
      %p182 = scmp.eq.s32.totalorder %s29, 0
      %p183 = por %p181, %p182
      %p184 = scmp.ne.s32.totalorder %s170, %s171
      %p185 = scmp.eq.s32.totalorder %s30, 1
      %p186 = por %p184, %p185
      %p188 = scmp.ne.s32.totalorder %s171, %s187
      %p189 = scmp.eq.s32.totalorder %s30, 0
      %p190 = por %p188, %p189
      %s191 = ssub.s32 %s31, %s43
      %s192 = ssub.s32 %s32, %s39
      %s193 = sor.u32 %s191, %s192
      %p194 = scmp.eq.s32.totalorder %s193, 0
      %s196 = sadd.s32 %s195, 1
      %s197 = scalar_select %p194, %s195, %s196
      %p200 = pneg %p194
      %p201 = scmp.eq.s32.totalorder %s24, 1
      %p202 = por %p200, %p201
      %p203 = scmp.ne.s32.totalorder %s195, %s198
      %p204 = scmp.eq.s32.totalorder %s24, 0
      %p205 = por %p203, %p204
      %p206 = scmp.ne.s32.totalorder %s195, %s198
      %p207 = scmp.eq.s32.totalorder %s29, 1
      %p208 = por %p206, %p207
      %p209 = scmp.ne.s32.totalorder %s198, %s199
      %p210 = scmp.eq.s32.totalorder %s29, 0
      %p211 = por %p209, %p210
      %p212 = scmp.ne.s32.totalorder %s198, %s199
      %p213 = scmp.eq.s32.totalorder %s30, 1
      %p214 = por %p212, %p213
      %p216 = scmp.ne.s32.totalorder %s199, %s215
      %p217 = scmp.eq.s32.totalorder %s30, 0
      %p218 = por %p216, %p217
      %p219 = scmp.le.s32.totalorder 1, %s24
      %p220 = scmp.lt.s32.totalorder %s24, 3
      %p221 = pnand %p219, %p220
      %p222 = pneg %p221
      // Predicated region
      $region9: #{tpu_custom_call.1} parent=5 // pred_check
        _
      $region10: #{tpu_custom_call.1} parent=5 // pred_check_branch
        %224 = sbr.rel (%p221) target = $region12
      $region11: #{tpu_custom_call.1} parent=5 // pred_region
        %s225 = ssub.s32 %s24, 1
        // Predicated region
        $region13: #{tpu_custom_call.1} parent=11 // pred_check
          %p226 = pneg %p85
        $region14: #{tpu_custom_call.1} parent=11 // pred_check_branch
          %228 = sbr.rel (%p226) target = $region16
        $region15: #{tpu_custom_call.1} parent=11 // pred_region
          %s230 = ssub.s32 256, 256
          %231 = vsyncadd [#allocation6], %s230
          %s232 = sshll.u32 [#allocation5], 4
          %s233 = int_to_ptr.vmem [resolvable:$true] %s232
          %238 = dma.hbm_to_vmem [thread:$0]  %s1, 256, %s233, [#allocation6], 64, 64, 4
        $region16: #{tpu_custom_call.1} parent=11 // pred_fallthru
          _
        // Predicated region
        $region17: #{tpu_custom_call.1} parent=11 // pred_check
          %p239 = pneg %p106
        $region18: #{tpu_custom_call.1} parent=11 // pred_check_branch
          %241 = sbr.rel (%p239) target = $region20
        $region19: #{tpu_custom_call.1} parent=11 // pred_region
          %s243 = ssub.s32 256, 256
          %244 = vsyncadd [#allocation6], %s243
          %s245 = sshll.u32 [#allocation7], 4
          %s246 = int_to_ptr.vmem [resolvable:$true] %s245
          %251 = dma.hbm_to_vmem [thread:$0]  %s2, 256, %s246, [#allocation6], 64, 64, 4
        $region20: #{tpu_custom_call.1} parent=11 // pred_fallthru
          _
        // Predicated region
        $region21: #{tpu_custom_call.1} parent=11 // pred_check
          %p252 = pneg %p127
        $region22: #{tpu_custom_call.1} parent=11 // pred_check_branch
          %254 = sbr.rel (%p252) target = $region24
        $region23: #{tpu_custom_call.1} parent=11 // pred_region
          %s256 = ssub.s32 256, 256
          %257 = vsyncadd [#allocation9], %s256
          %s258 = sshll.u32 [#allocation8], 4
          %s259 = int_to_ptr.vmem [resolvable:$true] %s258
          %264 = dma.hbm_to_vmem [thread:$0]  %s3, 256, %s259, [#allocation9], 64, 64, 4
        $region24: #{tpu_custom_call.1} parent=11 // pred_fallthru
          _
      $region12: #{tpu_custom_call.1} parent=5 // pred_fallthru
        _
      %p265 = scmp.lt.s32.totalorder %s24, 2
      // Predicated region
      $region25: #{tpu_custom_call.1} parent=5 // pred_check
        %p266 = pneg %p265
      $region26: #{tpu_custom_call.1} parent=5 // pred_check_branch
        %268 = sbr.rel (%p266) target = $region28
      $region27: #{tpu_custom_call.1} parent=5 // pred_region
        // Predicated region
        $region29: #{tpu_custom_call.1} parent=27 // pred_check
          %p269 = pneg %p58
        $region30: #{tpu_custom_call.1} parent=27 // pred_check_branch
          %271 = sbr.rel (%p269) target = $region32
        $region31: #{tpu_custom_call.1} parent=27 // pred_region
          %s272 = sand.u32 %s48, 1
          %s273 = scalar_lea.sflag [#allocation3], %s272
          %s274 = sand.u32 %s48, 1
          %s275 = smul.addr %s274, 4
          %s276 = scalar_lea.vmem [#allocation2], %s275
          %s278 = ssub.s32 64, 64
          %279 = vsyncadd %s273, %s278
          %s280 = sadd.s32 %s32, %s31
          %s281 = smul.addr %s280, 64
          %s282 = scalar_lea.hbm %s0, %s281
          %s284 = sshll.u32 %s276, 4
          %s285 = int_to_ptr.vmem [resolvable:$true] %s284
          %287 = dma.hbm_to_vmem [thread:$0]  %s282, 64, %s285, %s273
        $region32: #{tpu_custom_call.1} parent=27 // pred_fallthru
          _
      $region28: #{tpu_custom_call.1} parent=5 // pred_fallthru
        _
      %p288 = scmp.le.s32.totalorder 1, %s24
      %p289 = scmp.lt.s32.totalorder %s24, 3
      %p290 = pnand %p288, %p289
      %p291 = pneg %p290
      // Predicated region
      $region33: #{tpu_custom_call.1} parent=5 // pred_check
        _
      $region34: #{tpu_custom_call.1} parent=5 // pred_check_branch
        %293 = sbr.rel (%p290) target = $region36
      $region35: #{tpu_custom_call.1} parent=5 // pred_region
        %s294 = ssub.s32 %s24, 1
        %s295 = sand.u32 %s51, 1
        %s296 = scalar_lea.sflag [#allocation3], %s295
        %s297 = sand.u32 %s51, 1
        %s298 = smul.addr %s297, 4
        %s299 = scalar_lea.vmem [#allocation2], %s298
        // Predicated region
        $region37: #{tpu_custom_call.1} parent=35 // pred_check
          %p300 = pneg %p64
        $region38: #{tpu_custom_call.1} parent=35 // pred_check_branch
          %302 = sbr.rel (%p300) target = $region40
        $region39: #{tpu_custom_call.1} parent=35 // pred_region
          %303 = dma.done %s296, 64
        $region40: #{tpu_custom_call.1} parent=35 // pred_fallthru
          _
        // Predicated region
        $region41: #{tpu_custom_call.1} parent=35 // pred_check
          %p304 = pneg %p85
        $region42: #{tpu_custom_call.1} parent=35 // pred_check_branch
          %306 = sbr.rel (%p304) target = $region44
        $region43: #{tpu_custom_call.1} parent=35 // pred_region
          %307 = dma.done [#allocation6], 256
        $region44: #{tpu_custom_call.1} parent=35 // pred_fallthru
          _
        // Predicated region
        $region45: #{tpu_custom_call.1} parent=35 // pred_check
          %p308 = pneg %p106
        $region46: #{tpu_custom_call.1} parent=35 // pred_check_branch
          %310 = sbr.rel (%p308) target = $region48
        $region47: #{tpu_custom_call.1} parent=35 // pred_region
          %311 = dma.done [#allocation6], 256
        $region48: #{tpu_custom_call.1} parent=35 // pred_fallthru
          _
        // Predicated region
        $region49: #{tpu_custom_call.1} parent=35 // pred_check
          %p312 = pneg %p127
        $region50: #{tpu_custom_call.1} parent=35 // pred_check_branch
          %314 = sbr.rel (%p312) target = $region52
        $region51: #{tpu_custom_call.1} parent=35 // pred_region
          %315 = dma.done [#allocation9], 256
        $region52: #{tpu_custom_call.1} parent=35 // pred_fallthru
          _
        %s316 = sand.u32 %s51, 1
        %s317 = scalar_lea.sflag [#allocation3], %s316
        %s318 = sand.u32 %s51, 1
        %s319 = smul.addr %s318, 4
        %s320 = scalar_lea.vmem [#allocation2], %s319
        %p321 = pneg %p64
        %p322 = pneg %p61
        %p323 = pneg %p85
        %p324 = pneg %p82
        %p325 = pneg %p106
        %p326 = pneg %p103
        %p327 = pneg %p127
        %p328 = pneg %p124
        %p329 = pneg %p155
        %p330 = pneg %p152
        %s331 = sand.u32 %s142, 1
        %s332 = scalar_lea.sflag [#allocation4], %s331
        %s333 = sand.u32 %s142, 1
        %s334 = smul.addr %s333, 8
        %s335 = scalar_lea.vmem [#allocation10], %s334
        %p336 = pneg %p183
        %p337 = pneg %p180
        %p338 = scmp.lt.s32.totalorder %s33, 1
        %s339 = scalar_select %p338, %s33, 1
        %p340 = scmp.lt.s32.totalorder %s34, 0
        %s341 = scalar_select %p340, %s34, 0
        %s342 = smul.addr %s339, 4
        %s343 = sadd.s32 %s341, %s342
        %s344 = smul.addr %s343, 4
        %s345 = scalar_lea.vmem %s5, %s344
        %p346 = pneg %p211
        %p347 = pneg %p208
        %s348 = sand.u32 %s198, 1
        %s349 = scalar_lea.sflag [#allocation12], %s348
        %s350 = sand.u32 %s198, 1
        %s351 = smul.addr %s350, 8
        %s352 = scalar_lea.vmem [#allocation11], %s351
        %p353 = scmp.lt.s32.totalorder %s33, 1
        %s354 = scalar_select %p353, %s33, 1
        %p355 = scmp.lt.s32.totalorder %s34, 0
        %s356 = scalar_select %p355, %s34, 0
        %s357 = smul.addr %s354, 4
        %s358 = sadd.s32 %s356, %s357
        %s359 = smul.addr %s358, 4
        %s360 = scalar_lea.vmem %s5, %s359
        %v362 = vld [vmem:[%s299] sm:$0xf]
        %v363 = vld [vmem:[#allocation5] sm:$0xf]
        %v364 = vld [vmem:[#allocation5 + $0x4] sm:$0xf]
        %v367 = vunpack.c.l.b16 %v363
        %v368 = vunpack.c.l.b16 %v364
        %v369 = vpack.c.b16 %v368, %v367
        %vm370 = vcmask 261120
        %v372 = vsel %vm370, %v362, 0
        %v375 = vsel %vm370, %v369, 0
        %377 = vmatprep.subr.bf16.mxu0 0
        %378 = vmatpush1.bf16.xpose.msra.mxu0 %v375
        %379 = vmatprep.subr.bf16.mxu0 0
        %380 = vmatpush1.bf16.xpose.msra.mxu0 0
        %381 = vmatprep.subr.bf16.mxu0 0
        %382 = vmatpush1.bf16.xpose.msra.mxu0 0
        %383 = vmatprep.subr.bf16.mxu0 0
        %384 = vmatpush1.bf16.xpose.msra.mxu0 0
        %385 = vmatprep.subr.bf16.mxu0 0
        %386 = vmatpush1.bf16.xpose.msra.mxu0 0
        %387 = vmatprep.subr.bf16.mxu0 0
        %388 = vmatpush1.bf16.xpose.msra.mxu0 0
        %389 = vmatprep.subr.bf16.mxu0 0
        %390 = vmatpush1.bf16.xpose.msra.mxu0 0
        %391 = vmatprep.subr.bf16.mxu0 0
        %392 = vmatpush1.bf16.xpose.msra.mxu0 0
        %393 = vmatprep.subr.bf16.mxu0 0
        %394 = vmatpush1.bf16.xpose.msra.mxu0 0
        %395 = vmatprep.subr.bf16.mxu0 0
        %396 = vmatpush1.bf16.xpose.msra.mxu0 0
        %397 = vmatprep.subr.bf16.mxu0 0
        %398 = vmatpush1.bf16.xpose.msra.mxu0 0
        %399 = vmatprep.subr.bf16.mxu0 0
        %400 = vmatpush1.bf16.xpose.msra.mxu0 0
        %401 = vmatprep.subr.bf16.mxu0 0
        %402 = vmatpush1.bf16.xpose.msra.mxu0 0
        %403 = vmatprep.subr.bf16.mxu0 0
        %404 = vmatpush1.bf16.xpose.msra.mxu0 0
        %405 = vmatprep.subr.bf16.mxu0 0
        %406 = vmatpush1.bf16.xpose.msra.mxu0 0
        %407 = vmatprep.subr.bf16.mxu0 0
        %408 = vmatpush1.bf16.xpose.msra.mxu0 0
        %409 = vmatprep.mubr.bf16.mxu0 0
        %410 = vmatmul.mubr.bf16.gmra.mrb[0].mxu0 %v372
        %v411 = vpop.f32.mrb[0].mxu0
        %v412 = vadd.f32 0.0, %v411
        %v413 = vpop.f32.mrb[0].mxu0
        %v414 = vpop.f32.mrb[0].mxu0
        %v415 = vpop.f32.mrb[0].mxu0
        %416 = vdwg.mxu0
        %v417 = vpack.c.bf16 %v412, %v412
        %vm418 = vcmask 125952
        %419 = vst.msk [vmem:[%s335] sm:$0xf] %vm418, %v417
        %v420 = vld [vmem:[#allocation7] sm:$0xf]
        %v421 = vld [vmem:[#allocation7 + $0x4] sm:$0xf]
        %v424 = vunpack.c.l.b16 %v420
        %v425 = vunpack.c.l.b16 %v421
        %v426 = vpack.c.b16 %v425, %v424
        %v428 = vsel %vm370, %v426, 0
        %430 = vmatprep.subr.bf16.mxu0 0
        %431 = vmatpush1.bf16.xpose.msra.mxu0 %v372
        %432 = vmatprep.subr.bf16.mxu0 0
        %433 = vmatpush1.bf16.xpose.msra.mxu0 0
        %434 = vmatprep.subr.bf16.mxu0 0
        %435 = vmatpush1.bf16.xpose.msra.mxu0 0
        %436 = vmatprep.subr.bf16.mxu0 0
        %437 = vmatpush1.bf16.xpose.msra.mxu0 0
        %438 = vmatprep.subr.bf16.mxu0 0
        %439 = vmatpush1.bf16.xpose.msra.mxu0 0
        %440 = vmatprep.subr.bf16.mxu0 0
        %441 = vmatpush1.bf16.xpose.msra.mxu0 0
        %442 = vmatprep.subr.bf16.mxu0 0
        %443 = vmatpush1.bf16.xpose.msra.mxu0 0
        %444 = vmatprep.subr.bf16.mxu0 0
        %445 = vmatpush1.bf16.xpose.msra.mxu0 0
        %446 = vmatprep.subr.bf16.mxu0 0
        %447 = vmatpush1.bf16.xpose.msra.mxu0 0
        %448 = vmatprep.subr.bf16.mxu0 0
        %449 = vmatpush1.bf16.xpose.msra.mxu0 0
        %450 = vmatprep.subr.bf16.mxu0 0
        %451 = vmatpush1.bf16.xpose.msra.mxu0 0
        %452 = vmatprep.subr.bf16.mxu0 0
        %453 = vmatpush1.bf16.xpose.msra.mxu0 0
        %454 = vmatprep.subr.bf16.mxu0 0
        %455 = vmatpush1.bf16.xpose.msra.mxu0 0
        %456 = vmatprep.subr.bf16.mxu0 0
        %457 = vmatpush1.bf16.xpose.msra.mxu0 0
        %458 = vmatprep.subr.bf16.mxu0 0
        %459 = vmatpush1.bf16.xpose.msra.mxu0 0
        %460 = vmatprep.subr.bf16.mxu0 0
        %461 = vmatpush1.bf16.xpose.msra.mxu0 0
        %462 = vmatprep.mubr.bf16.mxu0 0
        %463 = vmatmul.mubr.bf16.gmra.mrb[0].mxu0 %v428
        %v464 = vpop.f32.mrb[0].mxu0
        %v465 = vadd.f32 0.0, %v464
        %v466 = vpop.f32.mrb[0].mxu0
        %v467 = vpop.f32.mrb[0].mxu0
        %v468 = vadd.f32 0.0, %v467
        %v469 = vpop.f32.mrb[0].mxu0
        %470 = vdwg.mxu0
        %v471 = vpack.c.bf16 %v468, %v465
        %v473 = vunpack.c.l.b16 %v471
        %v474 = vunpack.c.h.b16 %v471
        %v475 = vpack.c.b16 %v473, %v473
        %v476 = vpack.c.b16 %v474, %v474
        %vm479 = vcmask 60416
        %480 = vst.msk [vmem:[%s360] sm:$0xf] %vm479, %v475
        %481 = vst.msk [vmem:[%s360 + $0x4] sm:$0xf] %vm479, %v476
        %v482 = vld [vmem:[#allocation8] sm:$0xf]
        %v483 = vld [vmem:[#allocation8 + $0x4] sm:$0xf]
        %v486 = vunpack.c.l.b16 %v482
        %v487 = vunpack.c.l.b16 %v483
        %v488 = vpack.c.b16 %v487, %v486
        %v490 = vsel %vm370, %v488, 0
        %492 = vmatprep.subr.bf16.mxu0 0
        %493 = vmatpush1.bf16.xpose.msra.mxu0 %v490
        %494 = vmatprep.subr.bf16.mxu0 0
        %495 = vmatpush1.bf16.xpose.msra.mxu0 0
        %496 = vmatprep.subr.bf16.mxu0 0
        %497 = vmatpush1.bf16.xpose.msra.mxu0 0
        %498 = vmatprep.subr.bf16.mxu0 0
        %499 = vmatpush1.bf16.xpose.msra.mxu0 0
        %500 = vmatprep.subr.bf16.mxu0 0
        %501 = vmatpush1.bf16.xpose.msra.mxu0 0
        %502 = vmatprep.subr.bf16.mxu0 0
        %503 = vmatpush1.bf16.xpose.msra.mxu0 0
        %504 = vmatprep.subr.bf16.mxu0 0
        %505 = vmatpush1.bf16.xpose.msra.mxu0 0
        %506 = vmatprep.subr.bf16.mxu0 0
        %507 = vmatpush1.bf16.xpose.msra.mxu0 0
        %508 = vmatprep.subr.bf16.mxu0 0
        %509 = vmatpush1.bf16.xpose.msra.mxu0 0
        %510 = vmatprep.subr.bf16.mxu0 0
        %511 = vmatpush1.bf16.xpose.msra.mxu0 0
        %512 = vmatprep.subr.bf16.mxu0 0
        %513 = vmatpush1.bf16.xpose.msra.mxu0 0
        %514 = vmatprep.subr.bf16.mxu0 0
        %515 = vmatpush1.bf16.xpose.msra.mxu0 0
        %516 = vmatprep.subr.bf16.mxu0 0
        %517 = vmatpush1.bf16.xpose.msra.mxu0 0
        %518 = vmatprep.subr.bf16.mxu0 0
        %519 = vmatpush1.bf16.xpose.msra.mxu0 0
        %520 = vmatprep.subr.bf16.mxu0 0
        %521 = vmatpush1.bf16.xpose.msra.mxu0 0
        %522 = vmatprep.subr.bf16.mxu0 0
        %523 = vmatpush1.bf16.xpose.msra.mxu0 0
        %524 = vmatprep.mubr.bf16.mxu0 0
        %525 = vmatmul.mubr.bf16.gmra.mrb[0].mxu0 %v372
        %v526 = vpop.f32.mrb[0].mxu0
        %v527 = vadd.f32 0.0, %v526
        %v528 = vpop.f32.mrb[0].mxu0
        %v529 = vpop.f32.mrb[0].mxu0
        %v530 = vpop.f32.mrb[0].mxu0
        %531 = vdwg.mxu0
        %v532 = vpack.c.bf16 %v527, %v527
        %533 = vst.msk [vmem:[%s352] sm:$0xf] %vm418, %v532
        %s534 = scalar_lea.vmem [#allocation5], 8
        %v535 = vld [vmem:[%s534] sm:$0xf]
        %v536 = vld [vmem:[%s534 + $0x4] sm:$0xf]
        %v539 = vunpack.c.l.b16 %v535
        %v540 = vunpack.c.l.b16 %v536
        %v541 = vpack.c.b16 %v540, %v539
        %v543 = vsel %vm370, %v541, 0
        %545 = vmatprep.subr.bf16.mxu0 0
        %546 = vmatpush1.bf16.xpose.msra.mxu0 %v543
        %547 = vmatprep.subr.bf16.mxu0 0
        %548 = vmatpush1.bf16.xpose.msra.mxu0 0
        %549 = vmatprep.subr.bf16.mxu0 0
        %550 = vmatpush1.bf16.xpose.msra.mxu0 0
        %551 = vmatprep.subr.bf16.mxu0 0
        %552 = vmatpush1.bf16.xpose.msra.mxu0 0
        %553 = vmatprep.subr.bf16.mxu0 0
        %554 = vmatpush1.bf16.xpose.msra.mxu0 0
        %555 = vmatprep.subr.bf16.mxu0 0
        %556 = vmatpush1.bf16.xpose.msra.mxu0 0
        %557 = vmatprep.subr.bf16.mxu0 0
        %558 = vmatpush1.bf16.xpose.msra.mxu0 0
        %559 = vmatprep.subr.bf16.mxu0 0
        %560 = vmatpush1.bf16.xpose.msra.mxu0 0
        %561 = vmatprep.subr.bf16.mxu0 0
        %562 = vmatpush1.bf16.xpose.msra.mxu0 0
        %563 = vmatprep.subr.bf16.mxu0 0
        %564 = vmatpush1.bf16.xpose.msra.mxu0 0
        %565 = vmatprep.subr.bf16.mxu0 0
        %566 = vmatpush1.bf16.xpose.msra.mxu0 0
        %567 = vmatprep.subr.bf16.mxu0 0
        %568 = vmatpush1.bf16.xpose.msra.mxu0 0
        %569 = vmatprep.subr.bf16.mxu0 0
        %570 = vmatpush1.bf16.xpose.msra.mxu0 0
        %571 = vmatprep.subr.bf16.mxu0 0
        %572 = vmatpush1.bf16.xpose.msra.mxu0 0
        %573 = vmatprep.subr.bf16.mxu0 0
        %574 = vmatpush1.bf16.xpose.msra.mxu0 0
        %575 = vmatprep.subr.bf16.mxu0 0
        %576 = vmatpush1.bf16.xpose.msra.mxu0 0
        %577 = vmatprep.mubr.bf16.mxu0 0
        %578 = vmatmul.mubr.bf16.gmra.mrb[0].mxu0 %v372
        %v579 = vpop.f32.mrb[0].mxu0
        %v580 = vadd.f32 0.0, %v579
        %v581 = vpop.f32.mrb[0].mxu0
        %v582 = vpop.f32.mrb[0].mxu0
        %v583 = vpop.f32.mrb[0].mxu0
        %584 = vdwg.mxu0
        %v585 = vpack.c.bf16 %v580, %v580
        %s586 = scalar_lea.vmem %s335, 4 [#allocation10]
        %587 = vst.msk [vmem:[%s586] sm:$0xf] %vm418, %v585
        %s588 = scalar_lea.vmem [#allocation7], 8
        %v589 = vld [vmem:[%s588] sm:$0xf]
        %v590 = vld [vmem:[%s588 + $0x4] sm:$0xf]
        %v593 = vunpack.c.l.b16 %v589
        %v594 = vunpack.c.l.b16 %v590
        %v595 = vpack.c.b16 %v594, %v593
        %v597 = vsel %vm370, %v595, 0
        %599 = vmatprep.subr.bf16.mxu0 0
        %600 = vmatpush1.bf16.xpose.msra.mxu0 %v372
        %601 = vmatprep.subr.bf16.mxu0 0
        %602 = vmatpush1.bf16.xpose.msra.mxu0 0
        %603 = vmatprep.subr.bf16.mxu0 0
        %604 = vmatpush1.bf16.xpose.msra.mxu0 0
        %605 = vmatprep.subr.bf16.mxu0 0
        %606 = vmatpush1.bf16.xpose.msra.mxu0 0
        %607 = vmatprep.subr.bf16.mxu0 0
        %608 = vmatpush1.bf16.xpose.msra.mxu0 0
        %609 = vmatprep.subr.bf16.mxu0 0
        %610 = vmatpush1.bf16.xpose.msra.mxu0 0
        %611 = vmatprep.subr.bf16.mxu0 0
        %612 = vmatpush1.bf16.xpose.msra.mxu0 0
        %613 = vmatprep.subr.bf16.mxu0 0
        %614 = vmatpush1.bf16.xpose.msra.mxu0 0
        %615 = vmatprep.subr.bf16.mxu0 0
        %616 = vmatpush1.bf16.xpose.msra.mxu0 0
        %617 = vmatprep.subr.bf16.mxu0 0
        %618 = vmatpush1.bf16.xpose.msra.mxu0 0
        %619 = vmatprep.subr.bf16.mxu0 0
        %620 = vmatpush1.bf16.xpose.msra.mxu0 0
        %621 = vmatprep.subr.bf16.mxu0 0
        %622 = vmatpush1.bf16.xpose.msra.mxu0 0
        %623 = vmatprep.subr.bf16.mxu0 0
        %624 = vmatpush1.bf16.xpose.msra.mxu0 0
        %625 = vmatprep.subr.bf16.mxu0 0
        %626 = vmatpush1.bf16.xpose.msra.mxu0 0
        %627 = vmatprep.subr.bf16.mxu0 0
        %628 = vmatpush1.bf16.xpose.msra.mxu0 0
        %629 = vmatprep.subr.bf16.mxu0 0
        %630 = vmatpush1.bf16.xpose.msra.mxu0 0
        %631 = vmatprep.mubr.bf16.mxu0 0
        %632 = vmatmul.mubr.bf16.gmra.mrb[0].mxu0 %v597
        %v633 = vpop.f32.mrb[0].mxu0
        %v634 = vadd.f32 0.0, %v633
        %v635 = vpop.f32.mrb[0].mxu0
        %v636 = vpop.f32.mrb[0].mxu0
        %v637 = vadd.f32 0.0, %v636
        %v638 = vpop.f32.mrb[0].mxu0
        %639 = vdwg.mxu0
        %v640 = vpack.c.bf16 %v637, %v634
        %v642 = vunpack.c.l.b16 %v640
        %v643 = vunpack.c.h.b16 %v640
        %v644 = vpack.c.b16 %v642, %v642
        %v645 = vpack.c.b16 %v643, %v643
        %s648 = scalar_lea.vmem %s360, 8
        %649 = vst.msk [vmem:[%s648] sm:$0xf] %vm479, %v644
        %650 = vst.msk [vmem:[%s648 + $0x4] sm:$0xf] %vm479, %v645
        %s651 = scalar_lea.vmem [#allocation8], 8
        %v652 = vld [vmem:[%s651] sm:$0xf]
        %v653 = vld [vmem:[%s651 + $0x4] sm:$0xf]
        %v656 = vunpack.c.l.b16 %v652
        %v657 = vunpack.c.l.b16 %v653
        %v658 = vpack.c.b16 %v657, %v656
        %v660 = vsel %vm370, %v658, 0
        %662 = vmatprep.subr.bf16.mxu0 0
        %663 = vmatpush1.bf16.xpose.msra.mxu0 %v660
        %664 = vmatprep.subr.bf16.mxu0 0
        %665 = vmatpush1.bf16.xpose.msra.mxu0 0
        %666 = vmatprep.subr.bf16.mxu0 0
        %667 = vmatpush1.bf16.xpose.msra.mxu0 0
        %668 = vmatprep.subr.bf16.mxu0 0
        %669 = vmatpush1.bf16.xpose.msra.mxu0 0
        %670 = vmatprep.subr.bf16.mxu0 0
        %671 = vmatpush1.bf16.xpose.msra.mxu0 0
        %672 = vmatprep.subr.bf16.mxu0 0
        %673 = vmatpush1.bf16.xpose.msra.mxu0 0
        %674 = vmatprep.subr.bf16.mxu0 0
        %675 = vmatpush1.bf16.xpose.msra.mxu0 0
        %676 = vmatprep.subr.bf16.mxu0 0
        %677 = vmatpush1.bf16.xpose.msra.mxu0 0
        %678 = vmatprep.subr.bf16.mxu0 0
        %679 = vmatpush1.bf16.xpose.msra.mxu0 0
        %680 = vmatprep.subr.bf16.mxu0 0
        %681 = vmatpush1.bf16.xpose.msra.mxu0 0
        %682 = vmatprep.subr.bf16.mxu0 0
        %683 = vmatpush1.bf16.xpose.msra.mxu0 0
        %684 = vmatprep.subr.bf16.mxu0 0
        %685 = vmatpush1.bf16.xpose.msra.mxu0 0
        %686 = vmatprep.subr.bf16.mxu0 0
        %687 = vmatpush1.bf16.xpose.msra.mxu0 0
        %688 = vmatprep.subr.bf16.mxu0 0
        %689 = vmatpush1.bf16.xpose.msra.mxu0 0
        %690 = vmatprep.subr.bf16.mxu0 0
        %691 = vmatpush1.bf16.xpose.msra.mxu0 0
        %692 = vmatprep.subr.bf16.mxu0 0
        %693 = vmatpush1.bf16.xpose.msra.mxu0 0
        %694 = vmatprep.mubr.bf16.mxu0 0
        %695 = vmatmul.mubr.bf16.gmra.mrb[0].mxu0 %v372
        %v696 = vpop.f32.mrb[0].mxu0
        %v697 = vadd.f32 0.0, %v696
        %v698 = vpop.f32.mrb[0].mxu0
        %v699 = vpop.f32.mrb[0].mxu0
        %v700 = vpop.f32.mrb[0].mxu0
        %701 = vdwg.mxu0
        %v702 = vpack.c.bf16 %v697, %v697
        %s703 = scalar_lea.vmem %s352, 4 [#allocation11]
        %704 = vst.msk [vmem:[%s703] sm:$0xf] %vm418, %v702
        %s705 = sand.u32 %s142, 1
        %s706 = scalar_lea.sflag [#allocation4], %s705
        %s707 = sand.u32 %s142, 1
        %s708 = smul.addr %s707, 8
        %s709 = scalar_lea.vmem [#allocation10], %s708
        %p710 = scmp.lt.s32.totalorder %s33, 1
        %s711 = scalar_select %p710, %s33, 1
        %p712 = scmp.lt.s32.totalorder %s34, 0
        %s713 = scalar_select %p712, %s34, 0
        %s714 = smul.addr %s711, 4
        %s715 = sadd.s32 %s713, %s714
        %s716 = smul.addr %s715, 4
        %s717 = scalar_lea.vmem %s5, %s716
        %s718 = sand.u32 %s198, 1
        %s719 = scalar_lea.sflag [#allocation12], %s718
        %s720 = sand.u32 %s198, 1
        %s721 = smul.addr %s720, 8
        %s722 = scalar_lea.vmem [#allocation11], %s721
        // Predicated region
        $region53: #{tpu_custom_call.1} parent=35 // pred_check
          %p723 = pneg %p152
        $region54: #{tpu_custom_call.1} parent=35 // pred_check_branch
          %725 = sbr.rel (%p723) target = $region56
        $region55: #{tpu_custom_call.1} parent=35 // pred_region
          %s727 = ssub.s32 128, 128
          %728 = vsyncadd %s706, %s727
          %s729 = smul.addr %s33, 2
          %s730 = sadd.s32 %s34, %s729
          %s731 = smul.addr %s730, 64
          %s732 = scalar_lea.hbm %s4, %s731
          %s733 = sshll.u32 %s709, 4
          %s734 = int_to_ptr.vmem [resolvable:$true] %s733
          %739 = dma.vmem_to_hbm [thread:$0]  %s734, 128, %s732, %s706, 64, 64, 4
        $region56: #{tpu_custom_call.1} parent=35 // pred_fallthru
          _
        // Predicated region
        $region57: #{tpu_custom_call.1} parent=35 // pred_check
          %p740 = pneg %p180
        $region58: #{tpu_custom_call.1} parent=35 // pred_check_branch
          %742 = sbr.rel (%p740) target = $region60
        $region59: #{tpu_custom_call.1} parent=35 // pred_region
          _
        $region60: #{tpu_custom_call.1} parent=35 // pred_fallthru
          _
        // Predicated region
        $region61: #{tpu_custom_call.1} parent=35 // pred_check
          %p743 = pneg %p208
        $region62: #{tpu_custom_call.1} parent=35 // pred_check_branch
          %745 = sbr.rel (%p743) target = $region64
        $region63: #{tpu_custom_call.1} parent=35 // pred_region
          %s747 = ssub.s32 128, 128
          %748 = vsyncadd %s719, %s747
          %s749 = smul.addr %s33, 2
          %s750 = sadd.s32 %s34, %s749
          %s751 = smul.addr %s750, 64
          %s752 = scalar_lea.hbm %s6, %s751
          %s753 = sshll.u32 %s722, 4
          %s754 = int_to_ptr.vmem [resolvable:$true] %s753
          %759 = dma.vmem_to_hbm [thread:$0]  %s754, 128, %s752, %s719, 64, 64, 4
        $region64: #{tpu_custom_call.1} parent=35 // pred_fallthru
          _
      $region36: #{tpu_custom_call.1} parent=5 // pred_fallthru
        _
      %p760 = scmp.le.s32.totalorder 2, %s24
      // Predicated region
      $region65: #{tpu_custom_call.1} parent=5 // pred_check
        %p761 = pneg %p760
      $region66: #{tpu_custom_call.1} parent=5 // pred_check_branch
        %763 = sbr.rel (%p761) target = $region68
      $region67: #{tpu_custom_call.1} parent=5 // pred_region
        %s764 = ssub.s32 %s24, 2
        // Predicated region
        $region69: #{tpu_custom_call.1} parent=67 // pred_check
          %p765 = pneg %p158
        $region70: #{tpu_custom_call.1} parent=67 // pred_check_branch
          %767 = sbr.rel (%p765) target = $region72
        $region71: #{tpu_custom_call.1} parent=67 // pred_region
          %s768 = sand.u32 %s143, 1
          %s769 = scalar_lea.sflag [#allocation4], %s768
          %s770 = sand.u32 %s143, 1
          %s771 = smul.addr %s770, 8
          %s772 = scalar_lea.vmem [#allocation10], %s771
          %773 = dma.done %s769, 128
        $region72: #{tpu_custom_call.1} parent=67 // pred_fallthru
          _
        // Predicated region
        $region73: #{tpu_custom_call.1} parent=67 // pred_check
          %p774 = pneg %p186
        $region74: #{tpu_custom_call.1} parent=67 // pred_check_branch
          %776 = sbr.rel (%p774) target = $region76
        $region75: #{tpu_custom_call.1} parent=67 // pred_region
          %p777 = scmp.lt.s32.totalorder %s35, 1
          %s778 = scalar_select %p777, %s35, 1
          %p779 = scmp.lt.s32.totalorder %s36, 0
          %s780 = scalar_select %p779, %s36, 0
          %s781 = smul.addr %s778, 4
          %s782 = sadd.s32 %s780, %s781
          %s783 = smul.addr %s782, 4
          %s784 = scalar_lea.vmem %s5, %s783
        $region76: #{tpu_custom_call.1} parent=67 // pred_fallthru
          _
        // Predicated region
        $region77: #{tpu_custom_call.1} parent=67 // pred_check
          %p785 = pneg %p214
        $region78: #{tpu_custom_call.1} parent=67 // pred_check_branch
          %787 = sbr.rel (%p785) target = $region80
        $region79: #{tpu_custom_call.1} parent=67 // pred_region
          %s788 = sand.u32 %s199, 1
          %s789 = scalar_lea.sflag [#allocation12], %s788
          %s790 = sand.u32 %s199, 1
          %s791 = smul.addr %s790, 8
          %s792 = scalar_lea.vmem [#allocation11], %s791
          %793 = dma.done %s789, 128
        $region80: #{tpu_custom_call.1} parent=67 // pred_fallthru
          _
      $region68: #{tpu_custom_call.1} parent=5 // pred_fallthru
        _
    $region6: #{tpu_custom_call.1} parent=1 // loop_footer
      %s28 = sadd.s32 1, %s24
    $region7: #{tpu_custom_call.1} parent=1 // loop_footer_branch
      %23 = sbr.rel target = $region3
    $region8: #{tpu_custom_call.1} parent=1 // loop_exit
      _
    %794 = vsyncpa [#allocation3], 1
    %s795 = scalar_lea.sflag [#allocation3], 1
    %796 = vsyncpa %s795, 1
    %797 = vsyncpa [#allocation6], 1
    %798 = vsyncpa [#allocation9], 1
    %799 = vsyncpa [#allocation4], 1
    %s800 = scalar_lea.sflag [#allocation4], 1
    %801 = vsyncpa %s800, 1
    %802 = vsyncpa [#allocation12], 1
    %s803 = scalar_lea.sflag [#allocation12], 1
    %804 = vsyncpa %s803, 1

</llo_original>
